<compile_context>
chip_gen: v5e
topology: v5e:2x2
jax: 0.10.0
libtpu: 0.0.40
codegen_flags: <defaults>
</compile_context>

<pallas_src>
import jax
import jax.numpy as jnp
from jax import lax
from jax.experimental import pallas as pl
from jax.experimental.pallas import tpu as pltpu

_EPS = 1e-8


def _vmem_capacity_bytes():
    try:
        return int(pltpu.get_tpu_info().vmem_capacity_bytes)
    except Exception:
        return 64 * 1024 * 1024  # conservative default (v7x per-core VMEM)


def _tensorcores_per_chip():
    try:
        kind = jax.local_devices()[0].device_kind.lower()
    except Exception:
        return 1
    return 2 if ("v7" in kind or "7x" in kind) else 1


def _choose_tile_b(B, P, D, itemsize, budget_bytes, use_mxu_reduce):
    # Full per-step VMEM footprint (perf review):
    #   * 2x double-buffered input blocks : 2 * P * D * itemsize bytes / row
    #   * f32 temporaries (carried z_sum + ~2 live products): 3 * D * 4 / row
    #   * optional ones[D, 128] f32 operand for the MXU row-reduce (constant)
    budget = budget_bytes - (128 * D * 4 if use_mxu_reduce else 0)
    per_row = 2 * P * D * itemsize + 3 * D * 4
    tile = max(budget // max(per_row, 1), 8)
    tile = (tile // 8) * 8
    return B if tile >= B else int(tile)


def _build_kernel(P, B, D, tile_b, tiles_per_split, stacked, needs_mask,
                  use_mxu_reduce):
    n_in = 1 if stacked else P
    eps2 = _EPS * _EPS                   # per-patch norm clamp (squared)
    peps2 = (float(P) * _EPS) ** 2       # ||z_sum|| clamp == P * ||z_avg|| clamp

    def kernel(*refs):
        in_refs = refs[:n_in]
        out_ref = refs[n_in]             # (1,1,1) block, resident across the b axis

        b = pl.program_id(1)

        @pl.when(b == 0)
        def _init():
            out_ref[...] = jnp.zeros_like(out_ref)

        def patch(i):
            if stacked:
                return in_refs[0][i].astype(jnp.float32)   # [tile_b, D]
            return in_refs[i][...].astype(jnp.float32)     # [tile_b, D]

        if use_mxu_reduce:
            # Route the axis=-1 reductions through the otherwise-idle MXU.
            ones_cols = jnp.ones((D, 128), jnp.float32)    # built once, hoisted

            def rowsum(x):
                return jnp.dot(x, ones_cols,
                               preferred_element_type=jnp.float32)[:, :1]
        else:
            def rowsum(x):
                return jnp.sum(x, axis=-1, keepdims=True)

        # ---- pass 1: z_sum = sum_i z_i (only carried [tile_b, D] f32 array) ----
        z_sum = patch(0)
        for i in range(1, P):                               # P is small & static
            z_sum = z_sum + patch(i)
        # 1 / max(||z_sum||, P*eps)  ==  (1/P) / max(||z_avg||, eps)
        inv_ns = lax.rsqrt(jnp.maximum(rowsum(z_sum * z_sum), peps2))  # [tile_b,1]

        # ---- pass 2: sum_i cos(z_i, z_avg), re-reading VMEM-resident blocks ----
        cos = jnp.zeros((tile_b, 1), jnp.float32)
        for i in range(P):
            zi = patch(i)
            d_i = rowsum(zi * z_sum)                        # z_i . z_sum
            n_i = rowsum(zi * zi)                           # ||z_i||^2
            cos = cos + d_i * lax.rsqrt(jnp.maximum(n_i, eps2))
        cos = cos * inv_ns                                  # [tile_b, 1]

        if needs_mask:
            # zero rows past the real batch (block padding / clamped dup tiles)
            c = pl.program_id(0)
            t = c * tiles_per_split + b                     # un-clamped tile id
            row = t * tile_b + lax.broadcasted_iota(jnp.int32, (tile_b, 1), 0)
            cos = jnp.where(row < B, cos, 0.0)

        # Scalar per-tile partial sum, accumulated into the resident output block.
        out_ref[0] = out_ref[0] + jnp.sum(cos, axis=0, keepdims=True)

    return kernel


def similarity_loss(z_list, z_avg=None, *, tile_b=None, num_partials=None,
                    core_parallel=None, use_mxu_reduce=False):
    """Forward pass of Similarity_Loss. Returns (-z_sim, z_sim_detached).

    z_list may be a list/tuple of P arrays of shape [B, D] (preferred: avoids
    materializing a stacked copy) or a single stacked [P, B, D] array.
    z_avg is ignored (recomputed), exactly like the PyTorch module.
    """
    del z_avg  # recomputed from z_list, matching the torch module
    stacked = not isinstance(z_list, (list, tuple))
    if stacked:
        P, B, D = z_list.shape
        dtype = z_list.dtype
        operands = (z_list,)
    else:
        operands = tuple(z_list)
        P = len(operands)
        B, D = operands[0].shape
        dtype = operands[0].dtype
    itemsize = jnp.dtype(dtype).itemsize

    vmem_cap = _vmem_capacity_bytes()

    # ---- batch tiling: per-generation VMEM budget incl. f32 temporaries ----
    if tile_b is None:
        budget = min(int(vmem_cap * 0.40), 48 * 1024 * 1024)
        tile_b = _choose_tile_b(B, P, D, itemsize, budget, use_mxu_reduce)
    tile_b = int(tile_b)
    if tile_b >= B:
        tile_b = B                                   # single tile == full batch dim
    else:
        tile_b = max(8, (tile_b // 8) * 8)           # (8,128) block rule
        if tile_b >= B:
            tile_b = B
    num_tiles = -(-B // tile_b)

    # ---- split only when a second TensorCore can actually run it (v7x) ----
    cores = _tensorcores_per_chip()
    if num_partials is None:
        num_partials = cores if num_tiles >= cores else 1
    num_partials = max(1, min(int(num_partials), num_tiles))
    tiles_per_split = -(-num_tiles // num_partials)
    if core_parallel is None:
        core_parallel = (num_partials >= 2) and (cores >= 2)

    needs_mask = (num_partials * tiles_per_split * tile_b) != B

    def tile_idx(c, b):
        # clamp so duplicated trailing steps never DMA out of bounds (masked later)
        return jnp.minimum(c * tiles_per_split + b, num_tiles - 1)

    if stacked:
        in_specs = [pl.BlockSpec((P, tile_b, D), lambda c, b: (0, tile_idx(c, b), 0))]
    else:
        in_specs = [pl.BlockSpec((tile_b, D), lambda c, b: (tile_idx(c, b), 0))
                    for _ in range(P)]

    kernel = _build_kernel(P, B, D, tile_b, tiles_per_split, stacked,
                           needs_mask, use_mxu_reduce)

    # working set: double-buffered inputs + f32 temporaries (+ MXU ones operand)
    work = (2 * P * tile_b * D * itemsize + 3 * tile_b * D * 4
            + (128 * D * 4 if use_mxu_reduce else 0))
    vmem_limit = int(min(max(int(1.5 * work), 32 * 1024 * 1024),
                         int(vmem_cap * 0.85)))

    def _run(use_core_parallel):
        if use_core_parallel:
            lead = pltpu.CORE_PARALLEL
        elif num_partials > 1:
            lead = pltpu.PARALLEL
        else:
            lead = pltpu.ARBITRARY
        return pl.pallas_call(
            kernel,
            out_shape=jax.ShapeDtypeStruct((num_partials, 1, 1), jnp.float32),
            grid=(num_partials, tiles_per_split),
            in_specs=in_specs,
            out_specs=pl.BlockSpec((1, 1, 1), lambda c, b: (c, 0, 0)),
            compiler_params=pltpu.CompilerParams(
                dimension_semantics=(lead, pltpu.ARBITRARY),
                vmem_limit_bytes=vmem_limit,
            ),
        )(*operands)

    try:
        partials = _run(core_parallel)
    except Exception:
        if not core_parallel:
            raise
        partials = _run(False)   # graceful fallback if CORE_PARALLEL unsupported

    z_sim = jnp.sum(partials) * (1.0 / (P * B))
    # TODO(synk): backward pass (custom_vjp) not implemented; forward only.
    return -z_sim, lax.stop_gradient(z_sim)


def _reference(z):
    # pure-JAX mirror of the PyTorch forward (f32 math, per-norm eps clamp)
    z = z.astype(jnp.float32)
    z_avg = jnp.mean(z, axis=0)
    dots = jnp.sum(z * z_avg[None], axis=-1)
    n1 = jnp.maximum(jnp.sqrt(jnp.sum(z * z, axis=-1)), _EPS)
    n2 = jnp.maximum(jnp.sqrt(jnp.sum(z_avg * z_avg, axis=-1)), _EPS)[None]
    z_sim = jnp.mean(dots / (n1 * n2))
    return -z_sim, z_sim


if __name__ == "__main__":
    key = jax.random.PRNGKey(0)
    keys = jax.random.split(key, 8)

    # case 1: list of f32 patches, single batch tile, default settings
    P1, B1, D1 = 4, 8, 32
    z_list1 = [jax.random.normal(keys[i], (B1, D1), jnp.float32) for i in range(P1)]
    z_avg_dummy = jnp.zeros((B1, D1), jnp.float32)      # ignored, like in torch
    neg1, sim1 = similarity_loss(z_list1, z_avg_dummy)
    jax.block_until_ready((neg1, sim1))
    ref_neg1, ref_sim1 = _reference(jnp.stack(z_list1))
    assert jnp.allclose(neg1, ref_neg1, rtol=1e-5, atol=1e-5), (neg1, ref_neg1)
    assert jnp.allclose(sim1, ref_sim1, rtol=1e-5, atol=1e-5), (sim1, ref_sim1)

    # case 2: bf16 patches, batch not a multiple of the tile, MXU row-reduce path
    P2, B2, D2 = 3, 40, 128
    z_list2 = [
        jax.random.normal(keys[4 + i], (B2, D2), jnp.float32).astype(jnp.bfloat16)
        for i in range(P2)
    ]
    neg2, sim2 = similarity_loss(z_list2, None, tile_b=16, use_mxu_reduce=True)
    jax.block_until_ready((neg2, sim2))
    ref_neg2, ref_sim2 = _reference(jnp.stack(z_list2))
    # default-precision MXU passes may truncate the f32 products -> looser tol
    assert jnp.allclose(neg2, ref_neg2, rtol=5e-3, atol=5e-3), (neg2, ref_neg2)
    assert jnp.allclose(sim2, ref_sim2, rtol=5e-3, atol=5e-3), (sim2, ref_sim2)

    # case 3: pre-stacked [P, B, D] input path (no per-patch unstacking)
    neg3, sim3 = similarity_loss(jnp.stack(z_list1))
    jax.block_until_ready((neg3, sim3))
    assert jnp.allclose(sim3, ref_sim1, rtol=1e-5, atol=1e-5), (sim3, ref_sim1)

    # case 4: explicit 2-way split (clamped duplicate tile + mask), VPU reduce
    neg4, sim4 = similarity_loss(z_list2, None, tile_b=16, num_partials=2,
                                 core_parallel=False)
    jax.block_until_ready((neg4, sim4))
    assert jnp.allclose(sim4, ref_sim2, rtol=1e-4, atol=1e-4), (sim4, ref_sim2)

    print("KERNEL_OK")
</pallas_src>

<mosaic_0001>
module attributes {stable_mosaic.version = 11 : i64} {
  func.func @kernel(%arg0: i32, %arg1: i32, %arg2: memref<8x32xf32, #tpu.memory_space<vmem>>, %arg3: memref<8x32xf32, #tpu.memory_space<vmem>>, %arg4: memref<8x32xf32, #tpu.memory_space<vmem>>, %arg5: memref<8x32xf32, #tpu.memory_space<vmem>>, %arg6: memref<1x1x1xf32, #tpu.memory_space<vmem>>) attributes {dimension_semantics = [#tpu.dimension_semantics<arbitrary>, #tpu.dimension_semantics<arbitrary>], iteration_bounds = array<i64: 1, 1>, scalar_prefetch = 0 : i64, scratch_operands = 0 : i64, tpu.core_type = #tpu.core_type<tc>, window_params = [{transform_indices = @transform_0, window_bounds = array<i64: 8, 32>}, {transform_indices = @transform_1, window_bounds = array<i64: 8, 32>}, {transform_indices = @transform_2, window_bounds = array<i64: 8, 32>}, {transform_indices = @transform_3, window_bounds = array<i64: 8, 32>}, {transform_indices = @transform_4, window_bounds = array<i64: 1, 1, 1>}]} {
    %c0_i32 = arith.constant 0 : i32
    %0 = arith.cmpi eq, %arg1, %c0_i32 : i32
    %1 = arith.extui %0 : i1 to i32
    %c0_i32_0 = arith.constant 0 : i32
    %2 = arith.cmpi ne, %1, %c0_i32_0 : i32
    scf.if %2 {
      %cst_37 = arith.constant 0.000000e+00 : f32
      %74 = vector.broadcast %cst_37 : f32 to vector<1x1x1xf32>
      %c0_38 = arith.constant 0 : index
      %c0_39 = arith.constant 0 : index
      %c0_40 = arith.constant 0 : index
      %75 = vector.load %arg6[%c0_38, %c0_39, %c0_40] : memref<1x1x1xf32, #tpu.memory_space<vmem>>, vector<1x1x1xf32>
      tpu.vector_store %arg6[%c0_38, %c0_39, %c0_40], %74 {strides = array<i32>} : memref<1x1x1xf32, #tpu.memory_space<vmem>>, vector<1x1x1xf32>,
    } else {
    }
    %c0 = arith.constant 0 : index
    %c0_1 = arith.constant 0 : index
    %3 = vector.load %arg2[%c0, %c0_1] : memref<8x32xf32, #tpu.memory_space<vmem>>, vector<8x32xf32>
    %c0_2 = arith.constant 0 : index
    %c0_3 = arith.constant 0 : index
    %4 = vector.load %arg3[%c0_2, %c0_3] : memref<8x32xf32, #tpu.memory_space<vmem>>, vector<8x32xf32>
    %5 = arith.addf %3, %4 : vector<8x32xf32>
    %c0_4 = arith.constant 0 : index
    %c0_5 = arith.constant 0 : index
    %6 = vector.load %arg4[%c0_4, %c0_5] : memref<8x32xf32, #tpu.memory_space<vmem>>, vector<8x32xf32>
    %7 = arith.addf %5, %6 : vector<8x32xf32>
    %c0_6 = arith.constant 0 : index
    %c0_7 = arith.constant 0 : index
    %8 = vector.load %arg5[%c0_6, %c0_7] : memref<8x32xf32, #tpu.memory_space<vmem>>, vector<8x32xf32>
    %9 = arith.addf %7, %8 : vector<8x32xf32>
    %10 = arith.mulf %9, %9 : vector<8x32xf32>
    %cst = arith.constant dense<0.000000e+00> : vector<8xf32>
    %11 = vector.multi_reduction <add>, %10, %cst [1] : vector<8x32xf32> to vector<8xf32>
    %12 = vector.shape_cast %11 : vector<8xf32> to vector<8x1xf32>
    %cst_8 = arith.constant 1.600000e-15 : f32
    %13 = vector.broadcast %cst_8 : f32 to vector<8x1xf32>
    %14 = arith.maximumf %12, %13 : vector<8x1xf32>
    %15 = math.rsqrt %14 : vector<8x1xf32>
    %cst_9 = arith.constant 0.000000e+00 : f32
    %16 = vector.broadcast %cst_9 : f32 to vector<8x1xf32>
    %c0_10 = arith.constant 0 : index
    %c0_11 = arith.constant 0 : index
    %17 = vector.load %arg2[%c0_10, %c0_11] : memref<8x32xf32, #tpu.memory_space<vmem>>, vector<8x32xf32>
    %18 = arith.mulf %17, %9 : vector<8x32xf32>
    %cst_12 = arith.constant dense<0.000000e+00> : vector<8xf32>
    %19 = vector.multi_reduction <add>, %18, %cst_12 [1] : vector<8x32xf32> to vector<8xf32>
    %20 = vector.shape_cast %19 : vector<8xf32> to vector<8x1xf32>
    %21 = arith.mulf %17, %17 : vector<8x32xf32>
    %cst_13 = arith.constant dense<0.000000e+00> : vector<8xf32>
    %22 = vector.multi_reduction <add>, %21, %cst_13 [1] : vector<8x32xf32> to vector<8xf32>
    %23 = vector.shape_cast %22 : vector<8xf32> to vector<8x1xf32>
    %cst_14 = arith.constant 1.000000e-16 : f32
    %24 = vector.broadcast %cst_14 : f32 to vector<8x1xf32>
    %25 = arith.maximumf %23, %24 : vector<8x1xf32>
    %26 = math.rsqrt %25 : vector<8x1xf32>
    %27 = arith.mulf %20, %26 : vector<8x1xf32>
    %28 = arith.addf %16, %27 : vector<8x1xf32>
    %c0_15 = arith.constant 0 : index
    %c0_16 = arith.constant 0 : index
    %29 = vector.load %arg3[%c0_15, %c0_16] : memref<8x32xf32, #tpu.memory_space<vmem>>, vector<8x32xf32>
    %30 = arith.mulf %29, %9 : vector<8x32xf32>
    %cst_17 = arith.constant dense<0.000000e+00> : vector<8xf32>
    %31 = vector.multi_reduction <add>, %30, %cst_17 [1] : vector<8x32xf32> to vector<8xf32>
    %32 = vector.shape_cast %31 : vector<8xf32> to vector<8x1xf32>
    %33 = arith.mulf %29, %29 : vector<8x32xf32>
    %cst_18 = arith.constant dense<0.000000e+00> : vector<8xf32>
    %34 = vector.multi_reduction <add>, %33, %cst_18 [1] : vector<8x32xf32> to vector<8xf32>
    %35 = vector.shape_cast %34 : vector<8xf32> to vector<8x1xf32>
    %cst_19 = arith.constant 1.000000e-16 : f32
    %36 = vector.broadcast %cst_19 : f32 to vector<8x1xf32>
    %37 = arith.maximumf %35, %36 : vector<8x1xf32>
    %38 = math.rsqrt %37 : vector<8x1xf32>
    %39 = arith.mulf %32, %38 : vector<8x1xf32>
    %40 = arith.addf %28, %39 : vector<8x1xf32>
    %c0_20 = arith.constant 0 : index
    %c0_21 = arith.constant 0 : index
    %41 = vector.load %arg4[%c0_20, %c0_21] : memref<8x32xf32, #tpu.memory_space<vmem>>, vector<8x32xf32>
    %42 = arith.mulf %41, %9 : vector<8x32xf32>
    %cst_22 = arith.constant dense<0.000000e+00> : vector<8xf32>
    %43 = vector.multi_reduction <add>, %42, %cst_22 [1] : vector<8x32xf32> to vector<8xf32>
    %44 = vector.shape_cast %43 : vector<8xf32> to vector<8x1xf32>
    %45 = arith.mulf %41, %41 : vector<8x32xf32>
    %cst_23 = arith.constant dense<0.000000e+00> : vector<8xf32>
    %46 = vector.multi_reduction <add>, %45, %cst_23 [1] : vector<8x32xf32> to vector<8xf32>
    %47 = vector.shape_cast %46 : vector<8xf32> to vector<8x1xf32>
    %cst_24 = arith.constant 1.000000e-16 : f32
    %48 = vector.broadcast %cst_24 : f32 to vector<8x1xf32>
    %49 = arith.maximumf %47, %48 : vector<8x1xf32>
    %50 = math.rsqrt %49 : vector<8x1xf32>
    %51 = arith.mulf %44, %50 : vector<8x1xf32>
    %52 = arith.addf %40, %51 : vector<8x1xf32>
    %c0_25 = arith.constant 0 : index
    %c0_26 = arith.constant 0 : index
    %53 = vector.load %arg5[%c0_25, %c0_26] : memref<8x32xf32, #tpu.memory_space<vmem>>, vector<8x32xf32>
    %54 = arith.mulf %53, %9 : vector<8x32xf32>
    %cst_27 = arith.constant dense<0.000000e+00> : vector<8xf32>
    %55 = vector.multi_reduction <add>, %54, %cst_27 [1] : vector<8x32xf32> to vector<8xf32>
    %56 = vector.shape_cast %55 : vector<8xf32> to vector<8x1xf32>
    %57 = arith.mulf %53, %53 : vector<8x32xf32>
    %cst_28 = arith.constant dense<0.000000e+00> : vector<8xf32>
    %58 = vector.multi_reduction <add>, %57, %cst_28 [1] : vector<8x32xf32> to vector<8xf32>
    %59 = vector.shape_cast %58 : vector<8xf32> to vector<8x1xf32>
    %cst_29 = arith.constant 1.000000e-16 : f32
    %60 = vector.broadcast %cst_29 : f32 to vector<8x1xf32>
    %61 = arith.maximumf %59, %60 : vector<8x1xf32>
    %62 = math.rsqrt %61 : vector<8x1xf32>
    %63 = arith.mulf %56, %62 : vector<8x1xf32>
    %64 = arith.addf %52, %63 : vector<8x1xf32>
    %65 = arith.mulf %64, %15 : vector<8x1xf32>
    %c0_30 = arith.constant 0 : index
    %c0_31 = arith.constant 0 : index
    %c0_32 = arith.constant 0 : index
    %66 = vector.load %arg6[%c0_30, %c0_31, %c0_32] : memref<1x1x1xf32, #tpu.memory_space<vmem>>, vector<1x1x1xf32>
    %67 = vector.shape_cast %66 : vector<1x1x1xf32> to vector<1x1xf32>
    %cst_33 = arith.constant dense<0.000000e+00> : vector<1xf32>
    %68 = vector.multi_reduction <add>, %65, %cst_33 [0] : vector<8x1xf32> to vector<1xf32>
    %69 = vector.shape_cast %68 : vector<1xf32> to vector<1x1xf32>
    %70 = arith.addf %67, %69 : vector<1x1xf32>
    %c0_34 = arith.constant 0 : index
    %c0_35 = arith.constant 0 : index
    %c0_36 = arith.constant 0 : index
    %71 = vector.load %arg6[%c0_34, %c0_35, %c0_36] : memref<1x1x1xf32, #tpu.memory_space<vmem>>, vector<1x1x1xf32>
    %72 = vector.shape_cast %71 : vector<1x1x1xf32> to vector<1x1xf32>
    %73 = vector.shape_cast %70 : vector<1x1xf32> to vector<1x1x1xf32>
    tpu.vector_store %arg6[%c0_34, %c0_35, %c0_36], %73 {strides = array<i32>} : memref<1x1x1xf32, #tpu.memory_space<vmem>>, vector<1x1x1xf32>,
    return
  }
  func.func @transform_0(%arg0: i32, %arg1: i32) -> (i32, i32) {
    %c1_i32 = arith.constant 1 : i32
    %0 = arith.muli %arg0, %c1_i32 : i32
    %1 = arith.addi %0, %arg1 : i32
    %c0_i32 = arith.constant 0 : i32
    %2 = arith.minsi %1, %c0_i32 : i32
    %c0_i32_0 = arith.constant 0 : i32
    %c0_i32_1 = arith.constant 0 : i32
    return %2, %c0_i32_0 : i32, i32
  }
  func.func @transform_1(%arg0: i32, %arg1: i32) -> (i32, i32) {
    %c1_i32 = arith.constant 1 : i32
    %0 = arith.muli %arg0, %c1_i32 : i32
    %1 = arith.addi %0, %arg1 : i32
    %c0_i32 = arith.constant 0 : i32
    %2 = arith.minsi %1, %c0_i32 : i32
    %c0_i32_0 = arith.constant 0 : i32
    %c0_i32_1 = arith.constant 0 : i32
    return %2, %c0_i32_0 : i32, i32
  }
  func.func @transform_2(%arg0: i32, %arg1: i32) -> (i32, i32) {
    %c1_i32 = arith.constant 1 : i32
    %0 = arith.muli %arg0, %c1_i32 : i32
    %1 = arith.addi %0, %arg1 : i32
    %c0_i32 = arith.constant 0 : i32
    %2 = arith.minsi %1, %c0_i32 : i32
    %c0_i32_0 = arith.constant 0 : i32
    %c0_i32_1 = arith.constant 0 : i32
    return %2, %c0_i32_0 : i32, i32
  }
  func.func @transform_3(%arg0: i32, %arg1: i32) -> (i32, i32) {
    %c1_i32 = arith.constant 1 : i32
    %0 = arith.muli %arg0, %c1_i32 : i32
    %1 = arith.addi %0, %arg1 : i32
    %c0_i32 = arith.constant 0 : i32
    %2 = arith.minsi %1, %c0_i32 : i32
    %c0_i32_0 = arith.constant 0 : i32
    %c0_i32_1 = arith.constant 0 : i32
    return %2, %c0_i32_0 : i32, i32
  }
  func.func @transform_4(%arg0: i32, %arg1: i32) -> (i32, i32, i32) {
    %c0_i32 = arith.constant 0 : i32
    %c0_i32_0 = arith.constant 0 : i32
    %c0_i32_1 = arith.constant 0 : i32
    return %arg0, %c0_i32, %c0_i32_0 : i32, i32, i32
  }
}

</mosaic_0001>

<llo_original>
// kernel: tpu_custom_call.1
$region0: #{tpu_custom_call.1}
  #allocation0 [shape = 'u32[]', space=smem, size = 0x4, offset = 0x4, fixed_abs, tag = 'smem constant byte address 0x4 - core index']
  #allocation1 [shape = 'u32[72,128]{1,0:T(1,128)}', space=vmem, size = 0x9000, scoped, tag = 'internal scratch']
  %s0 = inlined_call_operand.hbm [shape: f32[8,32], index: 0, kind: input, shape index: {}]
  %s1 = inlined_call_operand.hbm [shape: f32[8,32], index: 1, kind: input, shape index: {}]
  %s2 = inlined_call_operand.hbm [shape: f32[8,32], index: 2, kind: input, shape index: {}]
  %s3 = inlined_call_operand.hbm [shape: f32[8,32], index: 3, kind: input, shape index: {}]
  %s4 = inlined_call_operand.hbm [shape: f32[1,1,1], index: 4, kind: output, shape index: {}]
  %s5 = sld [smem:[#allocation0]]
  $region46: #{tpu_custom_call.1} parent=0
    _
  %s7 = ssub.s32 1, %s5
  %s8 = scalar_select 0, %s7, %s5
  $region1: #{tpu_custom_call.1} parent=0
    #allocation2 [shape = 'u8[4096]{0}', space=vmem, size = 0x1000, scoped, tag = 'input window, operand 0, single buffered']
    #allocation3 [shape = 's32[1]{0}', space=sflag, size = 0x4, scoped, tag = 'scoped memory for tpu_custom_call.1']
    #allocation4 [shape = 's32[1]{0}', space=sflag, size = 0x4, scoped, tag = 'scoped memory for tpu_custom_call.1']
    #allocation5 [shape = 'u8[4096]{0}', space=vmem, size = 0x1000, scoped, tag = 'input window, operand 1, single buffered']
    #allocation6 [shape = 's32[1]{0}', space=sflag, size = 0x4, scoped, tag = 'scoped memory for tpu_custom_call.1']
    #allocation7 [shape = 'u8[4096]{0}', space=vmem, size = 0x1000, scoped, tag = 'input window, operand 2, single buffered']
    #allocation8 [shape = 'u8[4096]{0}', space=vmem, size = 0x1000, scoped, tag = 'input window, operand 3, single buffered']
    #allocation9 [shape = 's32[1]{0}', space=sflag, size = 0x4, scoped, tag = 'scoped memory for tpu_custom_call.1']
    #allocation10 [shape = 'u8[512]{0}', space=vmem, size = 0x400, scoped, tag = 'output window, operand 0, single buffered']
    %9 = vsyncpa [#allocation3], 0
    %10 = vsyncpa [#allocation6], 0
    %11 = vsyncpa [#allocation9], 0
    %12 = vsyncpa [#allocation4], 0
    // Predicated region
    $region2: #{tpu_custom_call.1} parent=1 // pred_check
      _
    $region3: #{tpu_custom_call.1} parent=1 // pred_check_branch
      %14 = sbr.rel (0) target = $region5
    $region4: #{tpu_custom_call.1} parent=1 // pred_region
      %s15 = sadd.s32 0, 0
      %p16 = scmp.lt.s32.totalorder %s15, 0
      %s17 = scalar_select %p16, %s15, 0
      %19 = vsyncadd [#allocation3], 0
      %s20 = smul.addr %s17, 8
      %s21 = scalar_lea.hbm %s0, %s20
      %s23 = sshll.u32 %s21, 4
      %s24 = int_to_ptr.hbm [resolvable:$true] %s23
      %s25 = sshll.u32 [#allocation2], 4
      %s26 = int_to_ptr.vmem [resolvable:$true] %s25
      %28 = dma.hbm_to_vmem [thread:$0]  %s24, 128, %s26, [#allocation3]
    $region5: #{tpu_custom_call.1} parent=1 // pred_fallthru
      _
    // Predicated region
    $region6: #{tpu_custom_call.1} parent=1 // pred_check
      _
    $region7: #{tpu_custom_call.1} parent=1 // pred_check_branch
      %30 = sbr.rel (0) target = $region9
    $region8: #{tpu_custom_call.1} parent=1 // pred_region
      %s31 = sadd.s32 0, 0
      %p32 = scmp.lt.s32.totalorder %s31, 0
      %s33 = scalar_select %p32, %s31, 0
      %35 = vsyncadd [#allocation6], 0
      %s36 = smul.addr %s33, 8
      %s37 = scalar_lea.hbm %s1, %s36
      %s39 = sshll.u32 %s37, 4
      %s40 = int_to_ptr.hbm [resolvable:$true] %s39
      %s41 = sshll.u32 [#allocation5], 4
      %s42 = int_to_ptr.vmem [resolvable:$true] %s41
      %44 = dma.hbm_to_vmem [thread:$0]  %s40, 128, %s42, [#allocation6]
    $region9: #{tpu_custom_call.1} parent=1 // pred_fallthru
      _
    // Predicated region
    $region10: #{tpu_custom_call.1} parent=1 // pred_check
      _
    $region11: #{tpu_custom_call.1} parent=1 // pred_check_branch
      %46 = sbr.rel (0) target = $region13
    $region12: #{tpu_custom_call.1} parent=1 // pred_region
      %s47 = sadd.s32 0, 0
      %p48 = scmp.lt.s32.totalorder %s47, 0
      %s49 = scalar_select %p48, %s47, 0
      %51 = vsyncadd [#allocation6], 0
      %s52 = smul.addr %s49, 8
      %s53 = scalar_lea.hbm %s2, %s52
      %s55 = sshll.u32 %s53, 4
      %s56 = int_to_ptr.hbm [resolvable:$true] %s55
      %s57 = sshll.u32 [#allocation7], 4
      %s58 = int_to_ptr.vmem [resolvable:$true] %s57
      %60 = dma.hbm_to_vmem [thread:$0]  %s56, 128, %s58, [#allocation6]
    $region13: #{tpu_custom_call.1} parent=1 // pred_fallthru
      _
    // Predicated region
    $region14: #{tpu_custom_call.1} parent=1 // pred_check
      _
    $region15: #{tpu_custom_call.1} parent=1 // pred_check_branch
      %62 = sbr.rel (0) target = $region17
    $region16: #{tpu_custom_call.1} parent=1 // pred_region
      %s63 = sadd.s32 0, 0
      %p64 = scmp.lt.s32.totalorder %s63, 0
      %s65 = scalar_select %p64, %s63, 0
      %67 = vsyncadd [#allocation9], 0
      %s68 = smul.addr %s65, 8
      %s69 = scalar_lea.hbm %s3, %s68
      %s71 = sshll.u32 %s69, 4
      %s72 = int_to_ptr.hbm [resolvable:$true] %s71
      %s73 = sshll.u32 [#allocation8], 4
      %s74 = int_to_ptr.vmem [resolvable:$true] %s73
      %76 = dma.hbm_to_vmem [thread:$0]  %s72, 128, %s74, [#allocation9]
    $region17: #{tpu_custom_call.1} parent=1 // pred_fallthru
      _
    // Predicated region
    $region18: #{tpu_custom_call.1} parent=1 // pred_check
      _
    $region19: #{tpu_custom_call.1} parent=1 // pred_check_branch
      %78 = sbr.rel (0) target = $region21
    $region20: #{tpu_custom_call.1} parent=1 // pred_region
      %80 = dma.done [#allocation3], 128
    $region21: #{tpu_custom_call.1} parent=1 // pred_fallthru
      _
    // Predicated region
    $region22: #{tpu_custom_call.1} parent=1 // pred_check
      _
    $region23: #{tpu_custom_call.1} parent=1 // pred_check_branch
      %82 = sbr.rel (0) target = $region25
    $region24: #{tpu_custom_call.1} parent=1 // pred_region
      %84 = dma.done [#allocation6], 128
    $region25: #{tpu_custom_call.1} parent=1 // pred_fallthru
      _
    // Predicated region
    $region26: #{tpu_custom_call.1} parent=1 // pred_check
      _
    $region27: #{tpu_custom_call.1} parent=1 // pred_check_branch
      %86 = sbr.rel (0) target = $region29
    $region28: #{tpu_custom_call.1} parent=1 // pred_region
      %88 = dma.done [#allocation6], 128
    $region29: #{tpu_custom_call.1} parent=1 // pred_fallthru
      _
    // Predicated region
    $region30: #{tpu_custom_call.1} parent=1 // pred_check
      _
    $region31: #{tpu_custom_call.1} parent=1 // pred_check_branch
      %90 = sbr.rel (0) target = $region33
    $region32: #{tpu_custom_call.1} parent=1 // pred_region
      %92 = dma.done [#allocation9], 128
    $region33: #{tpu_custom_call.1} parent=1 // pred_fallthru
      _
    %s93 = sadd.s32 0, 0
    %p94 = scmp.lt.s32.totalorder %s93, 0
    %s95 = scalar_select %p94, %s93, 0
    %s96 = sadd.s32 0, 0
    %p97 = scmp.lt.s32.totalorder %s96, 0
    %s98 = scalar_select %p97, %s96, 0
    %s99 = sadd.s32 0, 0
    %p100 = scmp.lt.s32.totalorder %s99, 0
    %s101 = scalar_select %p100, %s99, 0
    %s102 = sadd.s32 0, 0
    %p103 = scmp.lt.s32.totalorder %s102, 0
    %s104 = scalar_select %p103, %s102, 0
    %p105 = scmp.eq.s32.totalorder 0, 0
    // Predicated region
    $region34: #{tpu_custom_call.1} parent=1 // pred_check
      %p106 = pneg %p105
    $region35: #{tpu_custom_call.1} parent=1 // pred_check_branch
      %108 = sbr.rel (%p106) target = $region37
    $region36: #{tpu_custom_call.1} parent=1 // pred_region
      %vm109 = vcmask 0
      %110 = vst.msk [vmem:[#allocation10] sm:$0x1] %vm109, 0.0
    $region37: #{tpu_custom_call.1} parent=1 // pred_fallthru
      _
    %v111 = vld [vmem:[#allocation2] sm:$0xff]
    %v112 = vld [vmem:[#allocation5] sm:$0xff]
    %v113 = vadd.f32 %v111, %v112
    %v114 = vld [vmem:[#allocation7] sm:$0xff]
    %v115 = vadd.f32 %v113, %v114
    %v116 = vld [vmem:[#allocation8] sm:$0xff]
    %v117 = vadd.f32 %v115, %v116
    %v118 = vmul.f32 %v117, %v117
    %vm119 = vcmask 261120
    %v120 = vsel %vm119, %v118, 0.0
    %121 = vadd.xlane.f32.xlu0 %v120
    %v122 = vpop.xlane.xlu0 %121
    %v123 = vmax.f32 %v122, 1.6e-15
    %v124 = vrsqrt.pop %v123
    %v125 = vmul.f32 %v124, %v123
    %v126 = vmul.f32 %v125, %v124
    %v127 = vmul.f32 0.5, %v126
    %v128 = vsub.f32 1.5, %v127
    %v129 = vmul.f32 %v124, %v128
    %vm130 = vweird.f32 %v123
    %vm131 = vweird.f32 %v124
    %vm132 = vmor %vm130, %vm131
    %v133 = vsel %vm132, %v124, %v129
    %v134 = vmul.f32 %v111, %v117
    %v135 = vsel %vm119, %v134, 0.0
    %136 = vadd.xlane.f32.xlu0 %v135
    %v137 = vpop.xlane.xlu0 %136
    %v138 = vmul.f32 %v111, %v111
    %v139 = vsel %vm119, %v138, 0.0
    %140 = vadd.xlane.f32.xlu0 %v139
    %v141 = vpop.xlane.xlu0 %140
    %v142 = vmax.f32 %v141, 1e-16
    %v143 = vrsqrt.pop %v142
    %v144 = vmul.f32 %v143, %v142
    %v145 = vmul.f32 %v144, %v143
    %v146 = vmul.f32 0.5, %v145
    %v147 = vsub.f32 1.5, %v146
    %v148 = vmul.f32 %v143, %v147
    %vm149 = vweird.f32 %v142
    %vm150 = vweird.f32 %v143
    %vm151 = vmor %vm149, %vm150
    %v152 = vsel %vm151, %v143, %v148
    %v153 = vmul.f32 %v137, %v152
    %v154 = vadd.f32 %v153, 0.0
    %v155 = vmul.f32 %v112, %v117
    %v156 = vsel %vm119, %v155, 0.0
    %157 = vadd.xlane.f32.xlu0 %v156
    %v158 = vpop.xlane.xlu0 %157
    %v159 = vmul.f32 %v112, %v112
    %v160 = vsel %vm119, %v159, 0.0
    %161 = vadd.xlane.f32.xlu0 %v160
    %v162 = vpop.xlane.xlu0 %161
    %v163 = vmax.f32 %v162, 1e-16
    %v164 = vrsqrt.pop %v163
    %v165 = vmul.f32 %v164, %v163
    %v166 = vmul.f32 %v165, %v164
    %v167 = vmul.f32 0.5, %v166
    %v168 = vsub.f32 1.5, %v167
    %v169 = vmul.f32 %v164, %v168
    %vm170 = vweird.f32 %v163
    %vm171 = vweird.f32 %v164
    %vm172 = vmor %vm170, %vm171
    %v173 = vsel %vm172, %v164, %v169
    %v174 = vmul.f32 %v158, %v173
    %v175 = vadd.f32 %v154, %v174
    %v176 = vmul.f32 %v114, %v117
    %v177 = vsel %vm119, %v176, 0.0
    %178 = vadd.xlane.f32.xlu0 %v177
    %v179 = vpop.xlane.xlu0 %178
    %v180 = vmul.f32 %v114, %v114
    %v181 = vsel %vm119, %v180, 0.0
    %182 = vadd.xlane.f32.xlu0 %v181
    %v183 = vpop.xlane.xlu0 %182
    %v184 = vmax.f32 %v183, 1e-16
    %v185 = vrsqrt.pop %v184
    %v186 = vmul.f32 %v185, %v184
    %v187 = vmul.f32 %v186, %v185
    %v188 = vmul.f32 0.5, %v187
    %v189 = vsub.f32 1.5, %v188
    %v190 = vmul.f32 %v185, %v189
    %vm191 = vweird.f32 %v184
    %vm192 = vweird.f32 %v185
    %vm193 = vmor %vm191, %vm192
    %v194 = vsel %vm193, %v185, %v190
    %v195 = vmul.f32 %v179, %v194
    %v196 = vadd.f32 %v175, %v195
    %v197 = vmul.f32 %v116, %v117
    %v198 = vsel %vm119, %v197, 0.0
    %199 = vadd.xlane.f32.xlu0 %v198
    %v200 = vpop.xlane.xlu0 %199
    %v201 = vmul.f32 %v116, %v116
    %v202 = vsel %vm119, %v201, 0.0
    %203 = vadd.xlane.f32.xlu0 %v202
    %v204 = vpop.xlane.xlu0 %203
    %v205 = vmax.f32 %v204, 1e-16
    %v206 = vrsqrt.pop %v205
    %v207 = vmul.f32 %v206, %v205
    %v208 = vmul.f32 %v207, %v206
    %v209 = vmul.f32 0.5, %v208
    %v210 = vsub.f32 1.5, %v209
    %v211 = vmul.f32 %v206, %v210
    %vm212 = vweird.f32 %v205
    %vm213 = vweird.f32 %v206
    %vm214 = vmor %vm212, %vm213
    %v215 = vsel %vm214, %v206, %v211
    %v216 = vmul.f32 %v200, %v215
    %v217 = vadd.f32 %v196, %v216
    %v218 = vmul.f32 %v217, %v133
    %v219 = vld [vmem:[#allocation10] sm:$0x1]
    %v220 = vrot.slane %v218, 4
    %v221 = vadd.f32 %v218, %v220
    %v222 = vrot.slane %v221, 2
    %v223 = vadd.f32 %v221, %v222
    %v224 = vrot.slane %v223, 1
    %v225 = vadd.f32 %v223, %v224
    %v226 = vadd.f32 %v219, %v225
    %vm227 = vcmask 0
    %228 = vst.msk [vmem:[#allocation10] sm:$0x1] %vm227, %v226
    // Predicated region
    $region38: #{tpu_custom_call.1} parent=1 // pred_check
      _
    $region39: #{tpu_custom_call.1} parent=1 // pred_check_branch
      %230 = sbr.rel (0) target = $region41
    $region40: #{tpu_custom_call.1} parent=1 // pred_region
      %232 = vsyncadd [#allocation4], 0
      %s234 = sshll.u32 [#allocation10], 4
      %s235 = int_to_ptr.vmem [resolvable:$true] %s234
      %s236 = sshll.u32 %s4, 4
      %s237 = int_to_ptr.hbm [resolvable:$true] %s236
      %239 = dma.vmem_to_hbm [thread:$0]  %s235, 16, %s237, [#allocation4]
    $region41: #{tpu_custom_call.1} parent=1 // pred_fallthru
      _
    // Predicated region
    $region42: #{tpu_custom_call.1} parent=1 // pred_check
      _
    $region43: #{tpu_custom_call.1} parent=1 // pred_check_branch
      %241 = sbr.rel (0) target = $region45
    $region44: #{tpu_custom_call.1} parent=1 // pred_region
      %243 = dma.done [#allocation4], 16
    $region45: #{tpu_custom_call.1} parent=1 // pred_fallthru
      _
    %244 = vsyncpa [#allocation3], 1
    %245 = vsyncpa [#allocation6], 1
    %246 = vsyncpa [#allocation9], 1
    %247 = vsyncpa [#allocation4], 1

</llo_original>
